<compile_context>
chip_gen: v7x
topology: tpu7x:2x2x1
jax: 0.10.0
libtpu: 0.0.40
codegen_flags: <defaults>
</compile_context>

<pallas_src>
import functools

import jax
import jax.numpy as jnp
from jax import lax
from jax.experimental import pallas as pl
from jax.experimental.pallas import tpu as pltpu


def _round_up(x, m):
    return (x + m - 1) // m * m


def _net_kernel(x_ref, p_ref, o_ref, *, S, H, A, R2):
    # x_ref: [TB, S], p_ref: packed params [R2 + H + 1, max(H, A)], o_ref: [TB, A]
    x = x_ref[...]                                                    # [TB, S]

    # fc1 + ReLU  (weights/bias sliced out of the single packed buffer)
    w1 = p_ref[0:S, 0:H]                                              # [S, H]
    b1 = p_ref[S:S + 1, 0:H]                                          # [1, H]
    h = jnp.dot(x, w1, preferred_element_type=jnp.float32) + b1
    h = jnp.maximum(h, 0.0)                                           # [TB, H]

    # fc2
    w2 = p_ref[R2:R2 + H, 0:A]                                        # [H, A]
    b2 = p_ref[R2 + H:R2 + H + 1, 0:A]                                # [1, A]
    logits = jnp.dot(h, w2, preferred_element_type=jnp.float32) + b2  # [TB, A]

    if A == 2:
        # Closed-form binary softmax: no cross-lane max/sum reductions needed.
        d = logits[:, 1:2] - logits[:, 0:1]                           # [TB, 1]
        p1 = pl.reciprocal(1.0 + jnp.exp(-d), approx=True)            # sigmoid(d)
        col = lax.broadcasted_iota(jnp.int32, logits.shape, 1)        # [TB, 2]
        probs = jnp.where(col == 0, 1.0 - p1, p1)                     # single store below
        o_ref[...] = probs.astype(o_ref.dtype)
    else:
        # General numerically-stable softmax over dim=1 (last axis).
        m = jnp.max(logits, axis=-1, keepdims=True)
        e = jnp.exp(logits - m)
        denom = jnp.sum(e, axis=-1, keepdims=True)
        o_ref[...] = (e * pl.reciprocal(denom, approx=True)).astype(o_ref.dtype)


def pack_params(w1, b1, w2, b2):
    """Pack (w1[S,H], b1[H], w2[H,A], b2[A]) into one f32 buffer.

    Layout (rows):
      [0 : S]            w1
      [S]                b1
      [R2 : R2+H]        w2   (R2 = round_up(S+1, 8), sublane-aligned)
      [R2 + H]           b2
    Columns: max(H, A), unused tail zero-padded.
    """
    S, H = w1.shape
    _, A = w2.shape
    R2 = _round_up(S + 1, 8)
    rows = R2 + H + 1
    cols = max(H, A)
    p = jnp.zeros((rows, cols), jnp.float32)
    p = p.at[0:S, 0:H].set(w1.astype(jnp.float32))
    p = p.at[S, 0:H].set(b1.reshape(H).astype(jnp.float32))
    p = p.at[R2:R2 + H, 0:A].set(w2.astype(jnp.float32))
    p = p.at[R2 + H, 0:A].set(b2.reshape(A).astype(jnp.float32))
    return p, (S, H, A, R2)


def net_forward(x, packed_params, dims, *, block_b=1024):
    """x: [B, n_states] f32; packed_params/dims: from pack_params()."""
    S, H, A, R2 = dims
    B = x.shape[0]

    # Batch tile: multiple of 8 sublanes; large when B is large so per-grid-step
    # overhead (~0.35 us) is amortized; pad B up to a multiple of TB.
    TB = min(block_b, _round_up(B, 8))
    Bp = _round_up(B, TB)
    if Bp != B:
        x = jnp.pad(x, ((0, Bp - B), (0, 0)))

    kernel = functools.partial(_net_kernel, S=S, H=H, A=A, R2=R2)
    out = pl.pallas_call(
        kernel,
        out_shape=jax.ShapeDtypeStruct((Bp, A), jnp.float32),
        grid=(Bp // TB,),
        in_specs=[
            pl.BlockSpec((TB, S), lambda i: (i, 0)),                  # batch tile
            pl.BlockSpec(packed_params.shape, lambda i: (0, 0)),      # VMEM-resident params
        ],
        out_specs=pl.BlockSpec((TB, A), lambda i: (i, 0)),
        compiler_params=pltpu.CompilerParams(
            dimension_semantics=("parallel",)),                       # shards over TCs on v7x
    )(x, packed_params)
    return out[:B]


def init_params(key, n_states, n_hidden, n_actions):
    # Deterministic init mimicking PyTorch's default Linear init
    # (uniform in [-1/sqrt(fan_in), 1/sqrt(fan_in)]).
    k1, k2, k3, k4 = jax.random.split(key, 4)
    bound1 = 1.0 / jnp.sqrt(n_states)
    bound2 = 1.0 / jnp.sqrt(n_hidden)
    w1 = jax.random.uniform(k1, (n_states, n_hidden), jnp.float32, -bound1, bound1)
    b1 = jax.random.uniform(k2, (n_hidden,), jnp.float32, -bound1, bound1)
    w2 = jax.random.uniform(k3, (n_hidden, n_actions), jnp.float32, -bound2, bound2)
    b2 = jax.random.uniform(k4, (n_actions,), jnp.float32, -bound2, bound2)
    return w1, b1, w2, b2


if __name__ == "__main__":
    n_states, n_hidden, n_actions = 4, 32, 2
    batch = 8

    key = jax.random.PRNGKey(0)
    kx, kp = jax.random.split(key)
    x = jax.random.normal(kx, (batch, n_states), jnp.float32)
    w1, b1, w2, b2 = init_params(kp, n_states, n_hidden, n_actions)

    packed, dims = pack_params(w1, b1, w2, b2)
    out = net_forward(x, packed, dims)
    out = jax.block_until_ready(out)

    # Reference check in plain JAX (same math as the PyTorch module).
    h_ref = jnp.maximum(x @ w1 + b1[None, :], 0.0)
    logits_ref = h_ref @ w2 + b2[None, :]
    ref = jax.nn.softmax(logits_ref, axis=1)

    assert out.shape == (batch, n_actions)
    # approx=True reciprocal (EUP vrcp) -> allow a slightly looser tolerance.
    assert jnp.allclose(out, ref, atol=1e-3, rtol=1e-3)
    assert jnp.allclose(jnp.sum(out, axis=1), 1.0, atol=1e-3)

    print("KERNEL_OK")
</pallas_src>

<mosaic_0001>
module attributes {stable_mosaic.version = 11 : i64} {
  func.func @_net_kernel(%arg0: i32, %arg1: memref<8x4xf32, #tpu.memory_space<vmem>>, %arg2: memref<41x32xf32, #tpu.memory_space<vmem>>, %arg3: memref<8x2xf32, #tpu.memory_space<vmem>>) attributes {dimension_semantics = [#tpu.dimension_semantics<parallel>], iteration_bounds = array<i64: 1>, scalar_prefetch = 0 : i64, scratch_operands = 0 : i64, tpu.core_type = #tpu.core_type<tc>, window_params = [{transform_indices = @transform_0, window_bounds = array<i64: 8, 4>}, {pipeline_mode = #tpu.pipeline_mode<synchronous>, transform_indices = @transform_1, window_bounds = array<i64: 41, 32>}, {transform_indices = @transform_2, window_bounds = array<i64: 8, 2>}]} {
    %c0 = arith.constant 0 : index
    %c0_0 = arith.constant 0 : index
    %0 = vector.load %arg1[%c0, %c0_0] : memref<8x4xf32, #tpu.memory_space<vmem>>, vector<8x4xf32>
    %c0_1 = arith.constant 0 : index
    %c0_2 = arith.constant 0 : index
    %1 = vector.load %arg2[%c0_1, %c0_2] : memref<41x32xf32, #tpu.memory_space<vmem>>, vector<4x32xf32>
    %c4 = arith.constant 4 : index
    %c0_3 = arith.constant 0 : index
    %2 = vector.load %arg2[%c4, %c0_3] : memref<41x32xf32, #tpu.memory_space<vmem>>, vector<1x32xf32>
    %cst = arith.constant dense<0.000000e+00> : vector<8x32xf32>
    %3 = tpu.matmul %0, %1, %cst {dimension_numbers = #tpu.dot_dimension_numbers<[1], [0], [0], [1], [0, 0, 1, 1], [], []>} : vector<8x4xf32>, vector<4x32xf32>, vector<8x32xf32> -> vector<8x32xf32>
    %4 = vector.broadcast %2 : vector<1x32xf32> to vector<8x32xf32>
    %5 = arith.addf %3, %4 : vector<8x32xf32>
    %cst_4 = arith.constant 0.000000e+00 : f32
    %6 = vector.broadcast %cst_4 : f32 to vector<8x32xf32>
    %7 = arith.maximumf %5, %6 : vector<8x32xf32>
    %c8 = arith.constant 8 : index
    %c0_5 = arith.constant 0 : index
    %8 = vector.load %arg2[%c8, %c0_5] : memref<41x32xf32, #tpu.memory_space<vmem>>, vector<32x2xf32>
    %c40 = arith.constant 40 : index
    %c0_6 = arith.constant 0 : index
    %9 = vector.load %arg2[%c40, %c0_6] : memref<41x32xf32, #tpu.memory_space<vmem>>, vector<1x2xf32>
    %cst_7 = arith.constant dense<0.000000e+00> : vector<8x2xf32>
    %10 = tpu.matmul %7, %8, %cst_7 {dimension_numbers = #tpu.dot_dimension_numbers<[1], [0], [0], [1], [0, 0, 1, 1], [], []>} : vector<8x32xf32>, vector<32x2xf32>, vector<8x2xf32> -> vector<8x2xf32>
    %11 = vector.broadcast %9 : vector<1x2xf32> to vector<8x2xf32>
    %12 = arith.addf %10, %11 : vector<8x2xf32>
    %13 = vector.extract_strided_slice %12 {offsets = [0, 1], sizes = [8, 1], strides = [1, 1]} : vector<8x2xf32> to vector<8x1xf32>
    %14 = vector.extract_strided_slice %12 {offsets = [0, 0], sizes = [8, 1], strides = [1, 1]} : vector<8x2xf32> to vector<8x1xf32>
    %15 = arith.subf %13, %14 : vector<8x1xf32>
    %cst_8 = arith.constant 0.000000e+00 : f32
    %16 = vector.broadcast %cst_8 : f32 to vector<8x1xf32>
    %17 = arith.subf %16, %15 : vector<8x1xf32>
    %18 = math.exp %17 : vector<8x1xf32>
    %cst_9 = arith.constant 1.000000e+00 : f32
    %19 = vector.broadcast %cst_9 : f32 to vector<8x1xf32>
    %20 = arith.addf %19, %18 : vector<8x1xf32>
    %21 = tpu.reciprocal %20 {approx = true} : vector<8x1xf32> -> vector<8x1xf32>
    %22 = tpu.iota {dimensions = array<i32: 1>} : vector<8x2xi32>
    %c0_i32 = arith.constant 0 : i32
    %23 = vector.broadcast %c0_i32 : i32 to vector<8x2xi32>
    %24 = arith.cmpi eq, %22, %23 : vector<8x2xi32>
    %cst_10 = arith.constant 1.000000e+00 : f32
    %25 = vector.broadcast %cst_10 : f32 to vector<8x1xf32>
    %26 = arith.subf %25, %21 : vector<8x1xf32>
    %27 = vector.shape_cast %26 : vector<8x1xf32> to vector<8x1xf32>
    %28 = vector.broadcast %27 : vector<8x1xf32> to vector<8x2xf32>
    %29 = vector.shape_cast %21 : vector<8x1xf32> to vector<8x1xf32>
    %30 = vector.broadcast %29 : vector<8x1xf32> to vector<8x2xf32>
    %31 = arith.select %24, %28, %30 : vector<8x2xi1>, vector<8x2xf32>
    %c0_11 = arith.constant 0 : index
    %c0_12 = arith.constant 0 : index
    %32 = vector.load %arg3[%c0_11, %c0_12] : memref<8x2xf32, #tpu.memory_space<vmem>>, vector<8x2xf32>
    tpu.vector_store %arg3[%c0_11, %c0_12], %31 {strides = array<i32>} : memref<8x2xf32, #tpu.memory_space<vmem>>, vector<8x2xf32>,
    return
  }
  func.func @transform_0(%arg0: i32) -> (i32, i32) {
    %c0_i32 = arith.constant 0 : i32
    %c0_i32_0 = arith.constant 0 : i32
    return %arg0, %c0_i32 : i32, i32
  }
  func.func @transform_1(%arg0: i32) -> (i32, i32) {
    %c0_i32 = arith.constant 0 : i32
    %c0_i32_0 = arith.constant 0 : i32
    %c0_i32_1 = arith.constant 0 : i32
    return %c0_i32, %c0_i32_0 : i32, i32
  }
  func.func @transform_2(%arg0: i32) -> (i32, i32) {
    %c0_i32 = arith.constant 0 : i32
    %c0_i32_0 = arith.constant 0 : i32
    return %arg0, %c0_i32 : i32, i32
  }
}

</mosaic_0001>

<llo_original>
// kernel: tpu_custom_call.1
$region0: #{tpu_custom_call.1}
  #allocation0 [shape = 'u32[]', space=smem, size = 0x4, offset = 0x4, fixed_abs, tag = 'smem constant byte address 0x4 - core index']
  #allocation1 [shape = 'u32[144,128]{1,0:T(1,128)}', space=vmem, size = 0x12000, scoped, tag = 'internal scratch']
  %s0 = inlined_call_operand.vmem [shape: f32[8,4], index: 0, kind: input, shape index: {}]
  %s1 = inlined_call_operand.vmem [shape: f32[41,32], index: 1, kind: input, shape index: {}]
  %s2 = inlined_call_operand.vmem [shape: f32[8,2], index: 2, kind: output, shape index: {}]
  %s3 = sld [smem:[#allocation0]]
  $region18: #{tpu_custom_call.1} parent=0
    _
  %s5 = ssub.s32 1, %s3
  %s6 = scalar_select 0, %s5, %s3
  // Predicated region
  $region2: #{tpu_custom_call.1} parent=0 // pred_check
    _
  $region3: #{tpu_custom_call.1} parent=0 // pred_check_branch
    %8 = sbr.rel (0) target = $region5
  $region4: #{tpu_custom_call.1} parent=0 // pred_region
    _
  $region5: #{tpu_custom_call.1} parent=0 // pred_fallthru
    _
  // Predicated region
  $region6: #{tpu_custom_call.1} parent=0 // pred_check
    _
  $region7: #{tpu_custom_call.1} parent=0 // pred_check_branch
    %10 = sbr.rel (0) target = $region9
  $region8: #{tpu_custom_call.1} parent=0 // pred_region
    _
  $region9: #{tpu_custom_call.1} parent=0 // pred_fallthru
    _
  %v11 = vld [vmem:[%s0] sm:$0xff]
  %v12 = vld [vmem:[%s1] sm:$0xf]
  %v13 = vld [vmem:[%s1 + $0x4] sm:$0x1]
  %v14 = vlaneseq
  %v15 = vshrl.u32 %v14, 7
  %v16 = vsub.s32 0, %v15
  %v17 = vrot.slane %v13, %v16
  %vm18 = vcmask 31744
  %v20 = vsel %vm18, %v11, 0
  %vm22 = vcmask 1043456
  %v24 = vsel %vm22, %v12, 0
  %26 = vmatprep.subr.mxu0 0.0
  %27 = vmatpush1.msra.mxu0 %v24
  %28 = vmatprep.subr.mxu0 0.0
  %29 = vmatpush1.msra.mxu0 0.0
  %30 = vmatprep.subr.mxu0 0.0
  %31 = vmatpush1.msra.mxu0 0.0
  %32 = vmatprep.subr.mxu0 0.0
  %33 = vmatpush1.msra.mxu0 0.0
  %34 = vmatprep.subr.mxu0 0.0
  %35 = vmatpush1.msra.mxu0 0.0
  %36 = vmatprep.subr.mxu0 0.0
  %37 = vmatpush1.msra.mxu0 0.0
  %38 = vmatprep.subr.mxu0 0.0
  %39 = vmatpush1.msra.mxu0 0.0
  %40 = vmatprep.subr.mxu0 0.0
  %41 = vmatpush1.msra.mxu0 0.0
  %42 = vmatprep.subr.mxu0 0.0
  %43 = vmatpush1.msra.mxu0 0.0
  %44 = vmatprep.subr.mxu0 0.0
  %45 = vmatpush1.msra.mxu0 0.0
  %46 = vmatprep.subr.mxu0 0.0
  %47 = vmatpush1.msra.mxu0 0.0
  %48 = vmatprep.subr.mxu0 0.0
  %49 = vmatpush1.msra.mxu0 0.0
  %50 = vmatprep.subr.mxu0 0.0
  %51 = vmatpush1.msra.mxu0 0.0
  %52 = vmatprep.subr.mxu0 0.0
  %53 = vmatpush1.msra.mxu0 0.0
  %54 = vmatprep.subr.mxu0 0.0
  %55 = vmatpush1.msra.mxu0 0.0
  %56 = vmatprep.subr.mxu0 0.0
  %57 = vmatpush1.msra.mxu0 0.0
  %58 = vmatprep.subr.mxu0 0.0
  %59 = vmatpush1.msra.mxu0 0.0
  %60 = vmatprep.subr.mxu0 0.0
  %61 = vmatpush1.msra.mxu0 0.0
  %62 = vmatprep.subr.mxu0 0.0
  %63 = vmatpush1.msra.mxu0 0.0
  %64 = vmatprep.subr.mxu0 0.0
  %65 = vmatpush1.msra.mxu0 0.0
  %66 = vmatprep.subr.mxu0 0.0
  %67 = vmatpush1.msra.mxu0 0.0
  %68 = vmatprep.subr.mxu0 0.0
  %69 = vmatpush1.msra.mxu0 0.0
  %70 = vmatprep.subr.mxu0 0.0
  %71 = vmatpush1.msra.mxu0 0.0
  %72 = vmatprep.subr.mxu0 0.0
  %73 = vmatpush1.msra.mxu0 0.0
  %74 = vmatprep.subr.mxu0 0.0
  %75 = vmatpush1.msra.mxu0 0.0
  %76 = vmatprep.subr.mxu0 0.0
  %77 = vmatpush1.msra.mxu0 0.0
  %78 = vmatprep.subr.mxu0 0.0
  %79 = vmatpush1.msra.mxu0 0.0
  %80 = vmatprep.subr.mxu0 0.0
  %81 = vmatpush1.msra.mxu0 0.0
  %82 = vmatprep.subr.mxu0 0.0
  %83 = vmatpush1.msra.mxu0 0.0
  %84 = vmatprep.subr.mxu0 0.0
  %85 = vmatpush1.msra.mxu0 0.0
  %86 = vmatprep.subr.mxu0 0.0
  %87 = vmatpush1.msra.mxu0 0.0
  %88 = vmatprep.subr.mxu0 0.0
  %89 = vmatpush1.msra.mxu0 0.0
  %90 = vmatprep.mubr.f32.mxu0 0.0
  %91 = vmatmul.mubr.f32.gmra.mrb[0].mxu0 %v20
  %v92 = vpop.f32.mrb[0].mxu0
  %v93 = vadd.f32 %v17, %v92
  %v94 = vpop.f32.mrb[0].mxu0
  %95 = vdwg.mxu0
  %v96 = vmax.f32 %v93, 0.0
  %v97 = vld [vmem:[%s1 + $0x8] sm:$0xff]
  %v98 = vld [vmem:[%s1 + $0x10] sm:$0xff]
  %v99 = vld [vmem:[%s1 + $0x18] sm:$0xff]
  %v100 = vld [vmem:[%s1 + $0x20] sm:$0xff]
  %v101 = vld [vmem:[%s1 + $0x28] sm:$0x1]
  %v102 = vlaneseq
  %v103 = vshrl.u32 %v102, 7
  %v104 = vsub.s32 0, %v103
  %v105 = vrot.slane %v101, %v104
  %vm106 = vcmask 261120
  %v108 = vsel %vm106, %v96, 0
  %110 = vmatprep.subr.mxu0 0.0
  %111 = vmatpush1.msra.mxu0 %v97
  %112 = vmatprep.subr.mxu0 0.0
  %113 = vmatpush1.msra.mxu0 %v98
  %114 = vmatprep.subr.mxu0 0.0
  %115 = vmatpush1.msra.mxu0 %v99
  %116 = vmatprep.subr.mxu0 0.0
  %117 = vmatpush1.msra.mxu0 %v100
  %118 = vmatprep.subr.mxu0 0.0
  %119 = vmatpush1.msra.mxu0 0.0
  %120 = vmatprep.subr.mxu0 0.0
  %121 = vmatpush1.msra.mxu0 0.0
  %122 = vmatprep.subr.mxu0 0.0
  %123 = vmatpush1.msra.mxu0 0.0
  %124 = vmatprep.subr.mxu0 0.0
  %125 = vmatpush1.msra.mxu0 0.0
  %126 = vmatprep.subr.mxu0 0.0
  %127 = vmatpush1.msra.mxu0 0.0
  %128 = vmatprep.subr.mxu0 0.0
  %129 = vmatpush1.msra.mxu0 0.0
  %130 = vmatprep.subr.mxu0 0.0
  %131 = vmatpush1.msra.mxu0 0.0
  %132 = vmatprep.subr.mxu0 0.0
  %133 = vmatpush1.msra.mxu0 0.0
  %134 = vmatprep.subr.mxu0 0.0
  %135 = vmatpush1.msra.mxu0 0.0
  %136 = vmatprep.subr.mxu0 0.0
  %137 = vmatpush1.msra.mxu0 0.0
  %138 = vmatprep.subr.mxu0 0.0
  %139 = vmatpush1.msra.mxu0 0.0
  %140 = vmatprep.subr.mxu0 0.0
  %141 = vmatpush1.msra.mxu0 0.0
  %142 = vmatprep.subr.mxu0 0.0
  %143 = vmatpush1.msra.mxu0 0.0
  %144 = vmatprep.subr.mxu0 0.0
  %145 = vmatpush1.msra.mxu0 0.0
  %146 = vmatprep.subr.mxu0 0.0
  %147 = vmatpush1.msra.mxu0 0.0
  %148 = vmatprep.subr.mxu0 0.0
  %149 = vmatpush1.msra.mxu0 0.0
  %150 = vmatprep.subr.mxu0 0.0
  %151 = vmatpush1.msra.mxu0 0.0
  %152 = vmatprep.subr.mxu0 0.0
  %153 = vmatpush1.msra.mxu0 0.0
  %154 = vmatprep.subr.mxu0 0.0
  %155 = vmatpush1.msra.mxu0 0.0
  %156 = vmatprep.subr.mxu0 0.0
  %157 = vmatpush1.msra.mxu0 0.0
  %158 = vmatprep.subr.mxu0 0.0
  %159 = vmatpush1.msra.mxu0 0.0
  %160 = vmatprep.subr.mxu0 0.0
  %161 = vmatpush1.msra.mxu0 0.0
  %162 = vmatprep.subr.mxu0 0.0
  %163 = vmatpush1.msra.mxu0 0.0
  %164 = vmatprep.subr.mxu0 0.0
  %165 = vmatpush1.msra.mxu0 0.0
  %166 = vmatprep.subr.mxu0 0.0
  %167 = vmatpush1.msra.mxu0 0.0
  %168 = vmatprep.subr.mxu0 0.0
  %169 = vmatpush1.msra.mxu0 0.0
  %170 = vmatprep.subr.mxu0 0.0
  %171 = vmatpush1.msra.mxu0 0.0
  %172 = vmatprep.subr.mxu0 0.0
  %173 = vmatpush1.msra.mxu0 0.0
  %174 = vmatprep.mubr.f32.mxu0 0.0
  %175 = vmatmul.mubr.f32.gmra.mrb[0].mxu0 %v108
  %v176 = vpop.f32.mrb[0].mxu0
  %v177 = vadd.f32 %v105, %v176
  %v178 = vpop.f32.mrb[0].mxu0
  %179 = vdwg.mxu0
  %181 = vrot.lane.b32.xlu0 %v177, 1
  %v182 = vpop.permute.xlu0 %181
  %v184 = vsub.f32 %v177, %v182
  %v185 = vsub.f32 0.0, %v184
  %v186 = vmul.f32 %v185, 1.442695
  %v187 = vpow.pop %v186
  %v188 = vadd.f32 %v187, 1.0
  %v189 = vrcp.pop %v188
  %v190 = vlaneseq
  %v191 = vand.u32 %v190, 127
  %vm192 = vcmp.eq.s32.totalorder %v191, 0
  %v193 = vsub.f32 1.0, %v189
  %195 = vset.pattern.permute.xlu0 1
  %196 = vperm.xlu0 %195, %v193
  %v197 = vpop.permute.xlu0 %196
  %200 = vset.pattern.permute.xlu0 1
  %201 = vperm.xlu0 %200, %v189
  %v202 = vpop.permute.xlu0 %201
  %v204 = vsel %vm192, %v197, %v202
  %vm205 = vcmask 15360
  %206 = vst.msk [vmem:[%s2] sm:$0xff] %vm205, %v204
  // Predicated region
  $region10: #{tpu_custom_call.1} parent=0 // pred_check
    _
  $region11: #{tpu_custom_call.1} parent=0 // pred_check_branch
    %208 = sbr.rel (0) target = $region13
  $region12: #{tpu_custom_call.1} parent=0 // pred_region
    _
  $region13: #{tpu_custom_call.1} parent=0 // pred_fallthru
    _
  // Predicated region
  $region14: #{tpu_custom_call.1} parent=0 // pred_check
    _
  $region15: #{tpu_custom_call.1} parent=0 // pred_check_branch
    %210 = sbr.rel (0) target = $region17
  $region16: #{tpu_custom_call.1} parent=0 // pred_region
    _
  $region17: #{tpu_custom_call.1} parent=0 // pred_fallthru
    _

</llo_original>
